<compile_context>
chip_gen: v5e
topology: v5e:2x2
jax: 0.10.0
libtpu: 0.0.40
codegen_flags: <defaults>
</compile_context>

<pallas_src>
import math
import functools

import jax
import jax.numpy as jnp
from jax import lax
from jax.experimental import pallas as pl
from jax.experimental.pallas import tpu as pltpu


def _attn_kernel(q_ref, k_ref, v_ref, o_ref, m_sc, l_sc, *acc_sc,
                 scale_sq, heads_per_block, mxu_bf16, bf16_exp):
    """One grid step: G heads x one (q_block, kv_block) tile of flash attention.

    Ref shapes per grid step (the qkv-selector axis is squeezed by the BlockSpec):
      q_ref : [G, C, Tq]      k_ref/v_ref : [G, C, S]      o_ref : [G, C, Tq]
      m_sc/l_sc : [G, 1, Tq] f32 running max / denominator
      acc_sc (optional) : [G, C, Tq] f32 accumulator (o_ref is used when f32).
    """
    acc_ref = acc_sc[0] if acc_sc else o_ref          # f32 accumulator ref
    kv_idx = pl.program_id(2)

    @pl.when(kv_idx == 0)
    def _init():
        m_sc[...] = jnp.full(m_sc.shape, -jnp.inf, dtype=jnp.float32)
        l_sc[...] = jnp.zeros(l_sc.shape, dtype=jnp.float32)
        acc_ref[...] = jnp.zeros(acc_ref.shape, dtype=acc_ref.dtype)

    def _one_head(g, carry):
        q = q_ref[g]                                   # [C, Tq]
        # Fold both torch scales (q*scale, k*scale) into a single scale^2 on k
        # (the smaller per-step operand), applied in f32 *before* any bf16 cast.
        k = k_ref[g] * scale_sq                        # [C, S]
        v = v_ref[g]                                   # [C, S]
        if mxu_bf16:
            q = q.astype(jnp.bfloat16)
            k = k.astype(jnp.bfloat16)
            v = v.astype(jnp.bfloat16)

        # s[s', t] = sum_c k[c, s'] * q[c, t] — transposed-lhs matmul (native MXU
        # form, no in-kernel transpose); accumulate in f32.
        s = lax.dot_general(k, q, (((0,), (0,)), ((), ())),
                            preferred_element_type=jnp.float32)       # [S, Tq]

        m_prev = m_sc[g]                                               # [1, Tq]
        m_new = jnp.maximum(m_prev, jnp.max(s, axis=0, keepdims=True))
        alpha = jnp.exp(m_prev - m_new)                                # [1, Tq]
        x = s - m_new
        if bf16_exp:                      # optional EUP bf16 exp (v6e/v7x knob)
            x = x.astype(jnp.bfloat16)
        p = jnp.exp(x).astype(jnp.float32)                             # [S, Tq]

        l_sc[g] = alpha * l_sc[g] + jnp.sum(p, axis=0, keepdims=True)
        m_sc[g] = m_new

        # acc[c, t] += sum_s v[c, s] * p[s, t] — plain MXU matmul; softmax weights
        # cast back to the matmul dtype like the torch module.
        pv = lax.dot_general(v, p.astype(v.dtype), (((1,), (0,)), ((), ())),
                             preferred_element_type=jnp.float32)       # [C, Tq]
        acc_ref[g] = (alpha * acc_ref[g].astype(jnp.float32) + pv
                      ).astype(acc_ref.dtype)
        return carry

    # fori_loop (not a Python unroll) bounds the live range of the per-head
    # [S, Tq] f32 temporaries to a single head.
    lax.fori_loop(0, heads_per_block, _one_head, None)

    @pl.when(kv_idx == pl.num_programs(2) - 1)
    def _finalize():
        def _norm(g, carry):
            inv_l = 1.0 / l_sc[g]                      # exact normalization
            o_ref[g] = (acc_ref[g].astype(jnp.float32) * inv_l
                        ).astype(o_ref.dtype)
            return carry
        lax.fori_loop(0, heads_per_block, _norm, None)


def _vmem_capacity_bytes():
    """Physical VMEM per TensorCore (128 MiB v5e/v6e, 64 MiB v7x); safe fallback."""
    try:
        cap = getattr(pltpu.get_tpu_info(), "vmem_capacity_bytes", None)
        if cap:
            return int(cap)
    except Exception:
        pass
    return 64 * 1024 * 1024


def _largest_tile(length, target):
    """Largest 128-multiple divisor of `length` that is <= target, else `length`."""
    if length <= target:
        return length
    d = (target // 128) * 128
    while d >= 128:
        if length % d == 0:
            return d
        d -= 128
    # TODO(synk): ragged T with no 128-multiple divisor falls back to a single
    # full-length tile instead of a masked tail tile.
    return length


def qkv_attention_legacy(qkv, n_heads, *, heads_per_block=None, q_block=None,
                         kv_block=None, mxu_bf16=None, bf16_exp=False):
    """Pallas TPU QKVAttentionLegacy.forward:  [N, H*3*C, T] -> [N, H*C, T]."""
    bs, width, length = qkv.shape
    assert width % (3 * n_heads) == 0
    ch = width // (3 * n_heads)
    scale_sq = 1.0 / math.sqrt(ch)              # (1/ch**0.25)**2, folded once

    B = bs * n_heads
    # Free, contiguous reshape; axis 1 selects q / k / v for each head-row.
    qkv4 = qkv.reshape(B, 3, ch, length)

    if mxu_bf16 is None:                        # f32 matmuls are multi-pass on MXU
        mxu_bf16 = (qkv.dtype == jnp.float32)

    vmem_cap = _vmem_capacity_bytes()
    big_vmem = vmem_cap >= (100 << 20)          # v5e/v6e (128 MiB) vs v7x (64 MiB)

    # --- Q / KV tiling: bounds the f32 [S, Tq] score tile and the accumulator.
    if kv_block is None:
        kv_block = _largest_tile(length, 1024 if big_vmem else 512)
    if q_block is None:
        q_block = _largest_tile(length, 512 if big_vmem else 256)
    assert length % kv_block == 0 and length % q_block == 0
    num_q, num_kv = length // q_block, length // kv_block

    # --- Head batching under a full-VMEM footprint budget.
    itemsize = jnp.dtype(qkv.dtype).itemsize
    acc_in_out = (qkv.dtype == jnp.float32)     # accumulate directly into o_ref

    def _footprint(g):
        io = 2 * g * ch * (q_block + 2 * kv_block) * itemsize   # 2x-buffered q,k,v
        io += 2 * g * ch * q_block * itemsize                   # 2x-buffered o
        sc = g * 2 * q_block * 4                                 # m, l scratch
        if not acc_in_out:
            sc += g * ch * q_block * 4                           # acc scratch
        tmp = 2 * kv_block * q_block * 4                         # one head's s, p
        return io + sc + tmp

    if heads_per_block is None:
        heads_per_block = 1
        budget = int(0.4 * vmem_cap)
        for g in (16, 8, 4, 2):
            # Keep >= 2 parallel grid steps so both v7x TensorCores get work.
            if B % g == 0 and _footprint(g) <= budget and (B // g) * num_q >= 2:
                heads_per_block = g
                break
    G = heads_per_block
    assert B % G == 0, "heads_per_block must divide N * n_heads"

    grid = (B // G, num_q, num_kv)

    q_spec = pl.BlockSpec((G, None, ch, q_block), lambda b, qi, ki: (b, 0, 0, qi))
    k_spec = pl.BlockSpec((G, None, ch, kv_block), lambda b, qi, ki: (b, 1, 0, ki))
    v_spec = pl.BlockSpec((G, None, ch, kv_block), lambda b, qi, ki: (b, 2, 0, ki))
    o_spec = pl.BlockSpec((G, ch, q_block), lambda b, qi, ki: (b, 0, qi))

    scratch = [pltpu.VMEM((G, 1, q_block), jnp.float32),       # running max m
               pltpu.VMEM((G, 1, q_block), jnp.float32)]       # running denom l
    if not acc_in_out:
        scratch.append(pltpu.VMEM((G, ch, q_block), jnp.float32))   # f32 acc

    kernel = functools.partial(_attn_kernel, scale_sq=scale_sq,
                               heads_per_block=G, mxu_bf16=mxu_bf16,
                               bf16_exp=bf16_exp)

    out = pl.pallas_call(
        kernel,
        out_shape=jax.ShapeDtypeStruct((B, ch, length), qkv.dtype),
        grid_spec=pltpu.PrefetchScalarGridSpec(
            num_scalar_prefetch=0,
            grid=grid,
            in_specs=[q_spec, k_spec, v_spec],
            out_specs=o_spec,
            scratch_shapes=scratch,
        ),
        compiler_params=pltpu.CompilerParams(
            dimension_semantics=("parallel", "parallel", "arbitrary"),
            vmem_limit_bytes=min(int(0.75 * vmem_cap), 100 * 1024 * 1024),
        ),
    )(qkv4, qkv4, qkv4)

    return out.reshape(bs, n_heads * ch, length)


def _reference(qkv, n_heads):
    """Pure-JAX port of the PyTorch module (high-precision matmuls)."""
    bs, width, length = qkv.shape
    ch = width // (3 * n_heads)
    qkv_r = qkv.reshape(bs * n_heads, 3 * ch, length)
    q, k, v = qkv_r[:, :ch], qkv_r[:, ch:2 * ch], qkv_r[:, 2 * ch:]
    scale = 1.0 / math.sqrt(math.sqrt(ch))
    w = jnp.einsum('bct,bcs->bts', q * scale, k * scale,
                   precision=jax.lax.Precision.HIGHEST)
    w = jax.nn.softmax(w.astype(jnp.float32), axis=-1).astype(w.dtype)
    a = jnp.einsum('bts,bcs->bct', w, v, precision=jax.lax.Precision.HIGHEST)
    return a.reshape(bs, -1, length)


if __name__ == "__main__":
    k1, k2, k3 = jax.random.split(jax.random.PRNGKey(0), 3)

    # --- Case 1: tiny single-tile shape -----------------------------------
    n_heads, N, C, T = 2, 2, 8, 16
    qkv = jax.random.normal(k1, (N, n_heads * 3 * C, T), dtype=jnp.float32)
    ref = _reference(qkv, n_heads)

    out = jax.block_until_ready(qkv_attention_legacy(qkv, n_heads))  # bf16 MXU path
    assert out.shape == (N, n_heads * C, T)
    assert jnp.allclose(out, ref, atol=5e-2, rtol=5e-2)

    out_exact = jax.block_until_ready(
        qkv_attention_legacy(qkv, n_heads, mxu_bf16=False))          # f32 MXU path
    assert jnp.allclose(out_exact, ref, atol=1e-4, rtol=1e-4)

    # --- Case 2: multi-tile (q/kv tiling + online-softmax across KV steps) --
    n_heads2, N2, C2, T2 = 2, 1, 16, 1024
    qkv2 = jax.random.normal(k2, (N2, n_heads2 * 3 * C2, T2), dtype=jnp.float32)
    ref2 = _reference(qkv2, n_heads2)

    out2 = jax.block_until_ready(
        qkv_attention_legacy(qkv2, n_heads2, q_block=256, kv_block=256))
    assert out2.shape == (N2, n_heads2 * C2, T2)
    assert jnp.allclose(out2, ref2, atol=5e-2, rtol=5e-2)

    out2_exact = jax.block_until_ready(
        qkv_attention_legacy(qkv2, n_heads2, mxu_bf16=False,
                             q_block=256, kv_block=256))
    assert jnp.allclose(out2_exact, ref2, atol=1e-4, rtol=1e-4)

    # --- Case 3: bf16 input (exercises the separate f32 accumulator scratch) --
    qkv3 = jax.random.normal(k3, (N, n_heads * 3 * C, T), dtype=jnp.bfloat16)
    ref3 = _reference(qkv3, n_heads)
    out3 = jax.block_until_ready(qkv_attention_legacy(qkv3, n_heads))
    assert out3.dtype == jnp.bfloat16
    assert jnp.allclose(out3.astype(jnp.float32), ref3.astype(jnp.float32),
                        atol=5e-2, rtol=5e-2)

    print("KERNEL_OK")
</pallas_src>

<mosaic_0001>
module attributes {stable_mosaic.version = 11 : i64} {
  func.func @_attn_kernel(%arg0: i32, %arg1: i32, %arg2: i32, %arg3: memref<2x1x8x16xf32, #tpu.memory_space<vmem>>, %arg4: memref<2x1x8x16xf32, #tpu.memory_space<vmem>>, %arg5: memref<2x1x8x16xf32, #tpu.memory_space<vmem>>, %arg6: memref<2x8x16xf32, #tpu.memory_space<vmem>>, %arg7: memref<2x1x16xf32, #tpu.memory_space<vmem>>, %arg8: memref<2x1x16xf32, #tpu.memory_space<vmem>>) attributes {dimension_semantics = [#tpu.dimension_semantics<parallel>, #tpu.dimension_semantics<parallel>, #tpu.dimension_semantics<arbitrary>], iteration_bounds = array<i64: 2, 1, 1>, scalar_prefetch = 0 : i64, scratch_operands = 2 : i64, tpu.core_type = #tpu.core_type<tc>, window_params = [{transform_indices = @transform_0, window_bounds = array<i64: 2, 1, 8, 16>}, {transform_indices = @transform_1, window_bounds = array<i64: 2, 1, 8, 16>}, {transform_indices = @transform_2, window_bounds = array<i64: 2, 1, 8, 16>}, {transform_indices = @transform_3, window_bounds = array<i64: 2, 8, 16>}]} {
    %c0_i32 = arith.constant 0 : i32
    %0 = arith.cmpi eq, %arg2, %c0_i32 : i32
    %1 = arith.extui %0 : i1 to i32
    %c0_i32_0 = arith.constant 0 : i32
    %2 = arith.cmpi ne, %1, %c0_i32_0 : i32
    scf.if %2 {
      %cst = arith.constant 0xFF800000 : f32
      %7 = vector.broadcast %cst : f32 to vector<2x1x16xf32>
      %c0 = arith.constant 0 : index
      %c0_5 = arith.constant 0 : index
      %c0_6 = arith.constant 0 : index
      %8 = vector.load %arg7[%c0, %c0_5, %c0_6] : memref<2x1x16xf32, #tpu.memory_space<vmem>>, vector<2x1x16xf32>
      tpu.vector_store %arg7[%c0, %c0_5, %c0_6], %7 {strides = array<i32>} : memref<2x1x16xf32, #tpu.memory_space<vmem>>, vector<2x1x16xf32>,
      %cst_7 = arith.constant 0.000000e+00 : f32
      %9 = vector.broadcast %cst_7 : f32 to vector<2x1x16xf32>
      %c0_8 = arith.constant 0 : index
      %c0_9 = arith.constant 0 : index
      %c0_10 = arith.constant 0 : index
      %10 = vector.load %arg8[%c0_8, %c0_9, %c0_10] : memref<2x1x16xf32, #tpu.memory_space<vmem>>, vector<2x1x16xf32>
      tpu.vector_store %arg8[%c0_8, %c0_9, %c0_10], %9 {strides = array<i32>} : memref<2x1x16xf32, #tpu.memory_space<vmem>>, vector<2x1x16xf32>,
      %cst_11 = arith.constant 0.000000e+00 : f32
      %11 = vector.broadcast %cst_11 : f32 to vector<2x8x16xf32>
      %c0_12 = arith.constant 0 : index
      %c0_13 = arith.constant 0 : index
      %c0_14 = arith.constant 0 : index
      %12 = vector.load %arg6[%c0_12, %c0_13, %c0_14] : memref<2x8x16xf32, #tpu.memory_space<vmem>>, vector<2x8x16xf32>
      tpu.vector_store %arg6[%c0_12, %c0_13, %c0_14], %11 {strides = array<i32>} : memref<2x8x16xf32, #tpu.memory_space<vmem>>, vector<2x8x16xf32>,
    } else {
    }
    %c0_i32_1 = arith.constant 0 : i32
    %c2_i32 = arith.constant 2 : i32
    %3 = arith.addi %c0_i32_1, %c2_i32 : i32
    %c1_i32 = arith.constant 1 : i32
    scf.for %arg9 = %c0_i32_1 to %3 step %c1_i32  : i32 {
      %7 = arith.index_cast %arg9 : i32 to index
      %c0 = arith.constant 0 : index
      %c0_5 = arith.constant 0 : index
      %c0_6 = arith.constant 0 : index
      %8 = vector.load %arg3[%7, %c0, %c0_5, %c0_6] : memref<2x1x8x16xf32, #tpu.memory_space<vmem>>, vector<1x1x8x16xf32>
      %9 = vector.shape_cast %8 : vector<1x1x8x16xf32> to vector<8x16xf32>
      %10 = arith.index_cast %arg9 : i32 to index
      %c0_7 = arith.constant 0 : index
      %c0_8 = arith.constant 0 : index
      %c0_9 = arith.constant 0 : index
      %11 = vector.load %arg4[%10, %c0_7, %c0_8, %c0_9] : memref<2x1x8x16xf32, #tpu.memory_space<vmem>>, vector<1x1x8x16xf32>
      %12 = vector.shape_cast %11 : vector<1x1x8x16xf32> to vector<8x16xf32>
      %cst = arith.constant 0.353553385 : f32
      %13 = vector.broadcast %cst : f32 to vector<8x16xf32>
      %14 = arith.mulf %12, %13 : vector<8x16xf32>
      %15 = arith.index_cast %arg9 : i32 to index
      %c0_10 = arith.constant 0 : index
      %c0_11 = arith.constant 0 : index
      %c0_12 = arith.constant 0 : index
      %16 = vector.load %arg5[%15, %c0_10, %c0_11, %c0_12] : memref<2x1x8x16xf32, #tpu.memory_space<vmem>>, vector<1x1x8x16xf32>
      %17 = vector.shape_cast %16 : vector<1x1x8x16xf32> to vector<8x16xf32>
      %18 = arith.truncf %9 : vector<8x16xf32> to vector<8x16xbf16>
      %19 = arith.truncf %14 : vector<8x16xf32> to vector<8x16xbf16>
      %20 = arith.truncf %17 : vector<8x16xf32> to vector<8x16xbf16>
      %cst_13 = arith.constant dense<0.000000e+00> : vector<16x16xf32>
      %21 = tpu.matmul %19, %18, %cst_13 {dimension_numbers = #tpu.dot_dimension_numbers<[0], [0], [1], [1], [0, 1, 1, 1], [], []>} : vector<8x16xbf16>, vector<8x16xbf16>, vector<16x16xf32> -> vector<16x16xf32>
      %22 = arith.index_cast %arg9 : i32 to index
      %c0_14 = arith.constant 0 : index
      %c0_15 = arith.constant 0 : index
      %23 = vector.load %arg7[%22, %c0_14, %c0_15] : memref<2x1x16xf32, #tpu.memory_space<vmem>>, vector<1x1x16xf32>
      %24 = vector.shape_cast %23 : vector<1x1x16xf32> to vector<1x16xf32>
      %cst_16 = arith.constant dense<0xFF800000> : vector<16xf32>
      %25 = vector.multi_reduction <maximumf>, %21, %cst_16 [0] : vector<16x16xf32> to vector<16xf32>
      %26 = vector.shape_cast %25 : vector<16xf32> to vector<1x16xf32>
      %27 = arith.maximumf %24, %26 : vector<1x16xf32>
      %28 = arith.subf %24, %27 : vector<1x16xf32>
      %29 = math.exp %28 : vector<1x16xf32>
      %30 = vector.broadcast %27 : vector<1x16xf32> to vector<16x16xf32>
      %31 = arith.subf %21, %30 : vector<16x16xf32>
      %32 = math.exp %31 : vector<16x16xf32>
      %33 = arith.index_cast %arg9 : i32 to index
      %c0_17 = arith.constant 0 : index
      %c0_18 = arith.constant 0 : index
      %34 = vector.load %arg8[%33, %c0_17, %c0_18] : memref<2x1x16xf32, #tpu.memory_space<vmem>>, vector<1x1x16xf32>
      %35 = vector.shape_cast %34 : vector<1x1x16xf32> to vector<1x16xf32>
      %36 = arith.mulf %29, %35 : vector<1x16xf32>
      %cst_19 = arith.constant dense<0.000000e+00> : vector<16xf32>
      %37 = vector.multi_reduction <add>, %32, %cst_19 [0] : vector<16x16xf32> to vector<16xf32>
      %38 = vector.shape_cast %37 : vector<16xf32> to vector<1x16xf32>
      %39 = arith.addf %36, %38 : vector<1x16xf32>
      %40 = arith.index_cast %arg9 : i32 to index
      %c0_20 = arith.constant 0 : index
      %c0_21 = arith.constant 0 : index
      %41 = vector.load %arg8[%40, %c0_20, %c0_21] : memref<2x1x16xf32, #tpu.memory_space<vmem>>, vector<1x1x16xf32>
      %42 = vector.shape_cast %41 : vector<1x1x16xf32> to vector<1x16xf32>
      %43 = vector.shape_cast %39 : vector<1x16xf32> to vector<1x1x16xf32>
      tpu.vector_store %arg8[%40, %c0_20, %c0_21], %43 {strides = array<i32>} : memref<2x1x16xf32, #tpu.memory_space<vmem>>, vector<1x1x16xf32>,
      %44 = arith.index_cast %arg9 : i32 to index
      %c0_22 = arith.constant 0 : index
      %c0_23 = arith.constant 0 : index
      %45 = vector.load %arg7[%44, %c0_22, %c0_23] : memref<2x1x16xf32, #tpu.memory_space<vmem>>, vector<1x1x16xf32>
      %46 = vector.shape_cast %45 : vector<1x1x16xf32> to vector<1x16xf32>
      %47 = vector.shape_cast %27 : vector<1x16xf32> to vector<1x1x16xf32>
      tpu.vector_store %arg7[%44, %c0_22, %c0_23], %47 {strides = array<i32>} : memref<2x1x16xf32, #tpu.memory_space<vmem>>, vector<1x1x16xf32>,
      %48 = arith.truncf %32 : vector<16x16xf32> to vector<16x16xbf16>
      %cst_24 = arith.constant dense<0.000000e+00> : vector<8x16xf32>
      %49 = tpu.matmul %20, %48, %cst_24 {dimension_numbers = #tpu.dot_dimension_numbers<[1], [0], [0], [1], [0, 0, 1, 1], [], []>} : vector<8x16xbf16>, vector<16x16xbf16>, vector<8x16xf32> -> vector<8x16xf32>
      %50 = arith.index_cast %arg9 : i32 to index
      %c0_25 = arith.constant 0 : index
      %c0_26 = arith.constant 0 : index
      %51 = vector.load %arg6[%50, %c0_25, %c0_26] : memref<2x8x16xf32, #tpu.memory_space<vmem>>, vector<1x8x16xf32>
      %52 = vector.shape_cast %51 : vector<1x8x16xf32> to vector<8x16xf32>
      %53 = vector.broadcast %29 : vector<1x16xf32> to vector<8x16xf32>
      %54 = arith.mulf %53, %52 : vector<8x16xf32>
      %55 = arith.addf %54, %49 : vector<8x16xf32>
      %56 = arith.index_cast %arg9 : i32 to index
      %c0_27 = arith.constant 0 : index
      %c0_28 = arith.constant 0 : index
      %57 = vector.load %arg6[%56, %c0_27, %c0_28] : memref<2x8x16xf32, #tpu.memory_space<vmem>>, vector<1x8x16xf32>
      %58 = vector.shape_cast %57 : vector<1x8x16xf32> to vector<8x16xf32>
      %59 = vector.shape_cast %55 : vector<8x16xf32> to vector<1x8x16xf32>
      tpu.vector_store %arg6[%56, %c0_27, %c0_28], %59 {strides = array<i32>} : memref<2x8x16xf32, #tpu.memory_space<vmem>>, vector<1x8x16xf32>,
    }
    %c2_i32_2 = arith.constant 2 : i32
    %c0_i32_3 = arith.constant 0 : i32
    %4 = arith.cmpi eq, %arg2, %c0_i32_3 : i32
    %5 = arith.extui %4 : i1 to i32
    %c0_i32_4 = arith.constant 0 : i32
    %6 = arith.cmpi ne, %5, %c0_i32_4 : i32
    scf.if %6 {
      %c0_i32_5 = arith.constant 0 : i32
      %c2_i32_6 = arith.constant 2 : i32
      %7 = arith.addi %c0_i32_5, %c2_i32_6 : i32
      %c1_i32_7 = arith.constant 1 : i32
      scf.for %arg9 = %c0_i32_5 to %7 step %c1_i32_7  : i32 {
        %8 = arith.index_cast %arg9 : i32 to index
        %c0 = arith.constant 0 : index
        %c0_9 = arith.constant 0 : index
        %9 = vector.load %arg8[%8, %c0, %c0_9] : memref<2x1x16xf32, #tpu.memory_space<vmem>>, vector<1x1x16xf32>
        %10 = vector.shape_cast %9 : vector<1x1x16xf32> to vector<1x16xf32>
        %cst = arith.constant 1.000000e+00 : f32
        %11 = vector.broadcast %cst : f32 to vector<1x16xf32>
        %12 = arith.divf %11, %10 : vector<1x16xf32>
        %13 = arith.index_cast %arg9 : i32 to index
        %c0_10 = arith.constant 0 : index
        %c0_11 = arith.constant 0 : index
        %14 = vector.load %arg6[%13, %c0_10, %c0_11] : memref<2x8x16xf32, #tpu.memory_space<vmem>>, vector<1x8x16xf32>
        %15 = vector.shape_cast %14 : vector<1x8x16xf32> to vector<8x16xf32>
        %16 = vector.broadcast %12 : vector<1x16xf32> to vector<8x16xf32>
        %17 = arith.mulf %15, %16 : vector<8x16xf32>
        %18 = arith.index_cast %arg9 : i32 to index
        %c0_12 = arith.constant 0 : index
        %c0_13 = arith.constant 0 : index
        %19 = vector.load %arg6[%18, %c0_12, %c0_13] : memref<2x8x16xf32, #tpu.memory_space<vmem>>, vector<1x8x16xf32>
        %20 = vector.shape_cast %19 : vector<1x8x16xf32> to vector<8x16xf32>
        %21 = vector.shape_cast %17 : vector<8x16xf32> to vector<1x8x16xf32>
        tpu.vector_store %arg6[%18, %c0_12, %c0_13], %21 {strides = array<i32>} : memref<2x8x16xf32, #tpu.memory_space<vmem>>, vector<1x8x16xf32>,
      }
      %c2_i32_8 = arith.constant 2 : i32
    } else {
    }
    return
  }
  func.func @transform_0(%arg0: i32, %arg1: i32, %arg2: i32) -> (i32, i32, i32, i32) {
    %c0_i32 = arith.constant 0 : i32
    %c0_i32_0 = arith.constant 0 : i32
    %c0_i32_1 = arith.constant 0 : i32
    return %arg0, %c0_i32, %c0_i32_0, %arg1 : i32, i32, i32, i32
  }
  func.func @transform_1(%arg0: i32, %arg1: i32, %arg2: i32) -> (i32, i32, i32, i32) {
    %c1_i32 = arith.constant 1 : i32
    %c0_i32 = arith.constant 0 : i32
    %c0_i32_0 = arith.constant 0 : i32
    return %arg0, %c1_i32, %c0_i32, %arg2 : i32, i32, i32, i32
  }
  func.func @transform_2(%arg0: i32, %arg1: i32, %arg2: i32) -> (i32, i32, i32, i32) {
    %c2_i32 = arith.constant 2 : i32
    %c0_i32 = arith.constant 0 : i32
    %c0_i32_0 = arith.constant 0 : i32
    return %arg0, %c2_i32, %c0_i32, %arg2 : i32, i32, i32, i32
  }
  func.func @transform_3(%arg0: i32, %arg1: i32, %arg2: i32) -> (i32, i32, i32) {
    %c0_i32 = arith.constant 0 : i32
    %c0_i32_0 = arith.constant 0 : i32
    return %arg0, %c0_i32, %arg1 : i32, i32, i32
  }
}

</mosaic_0001>

<llo_original>
// kernel: tpu_custom_call.1
$region0: #{tpu_custom_call.1}
  #allocation0 [shape = 'u32[]', space=smem, size = 0x4, offset = 0x4, fixed_abs, tag = 'smem constant byte address 0x4 - core index']
  #allocation1 [shape = 'u32[72,128]{1,0:T(1,128)}', space=vmem, size = 0x9000, scoped, tag = 'internal scratch']
  #allocation2 [shape = 'f32[2,1,16]{2,1,0:T(1,128)}', space=vmem, size = 0x400, scoped, tag = 'scratch operand']
  #allocation3 [shape = 'f32[2,1,16]{2,1,0:T(1,128)}', space=vmem, size = 0x400, scoped, tag = 'scratch operand']
  %s0 = inlined_call_operand.hbm [shape: f32[4,3,8,16], index: 0, kind: input, shape index: {}]
  %s1 = inlined_call_operand.hbm [shape: f32[4,3,8,16], index: 1, kind: input, shape index: {}]
  %s2 = inlined_call_operand.hbm [shape: f32[4,3,8,16], index: 2, kind: input, shape index: {}]
  %s3 = inlined_call_operand.hbm [shape: f32[4,8,16], index: 3, kind: output, shape index: {}]
  %s4 = sld [smem:[#allocation0]]
  $region79: #{tpu_custom_call.1} parent=0
    _
  %s6 = ssub.s32 1, %s4
  %s7 = scalar_select 0, %s6, %s4
  $region1: #{tpu_custom_call.1} parent=0
    #allocation4 [shape = 'u8[16384]{0}', space=vmem, size = 0x4000, scoped, tag = 'input window, operand 0']
    #allocation5 [shape = 's32[2]{0}', space=sflag, size = 0x8, scoped, tag = 'scoped memory for tpu_custom_call.1']
    #allocation6 [shape = 's32[2]{0}', space=sflag, size = 0x8, scoped, tag = 'scoped memory for tpu_custom_call.1']
    #allocation7 [shape = 'u8[16384]{0}', space=vmem, size = 0x4000, scoped, tag = 'input window, operand 1']
    #allocation8 [shape = 's32[2]{0}', space=sflag, size = 0x8, scoped, tag = 'scoped memory for tpu_custom_call.1']
    #allocation9 [shape = 'u8[16384]{0}', space=vmem, size = 0x4000, scoped, tag = 'input window, operand 2']
    #allocation10 [shape = 'u8[16384]{0}', space=vmem, size = 0x4000, scoped, tag = 'output window, operand 0']
    %8 = vsyncpa [#allocation5], 0
    %s9 = scalar_lea.sflag [#allocation5], 1
    %10 = vsyncpa %s9, 0
    %11 = vsyncpa [#allocation8], 0
    %s12 = scalar_lea.sflag [#allocation8], 1
    %13 = vsyncpa %s12, 0
    %14 = vsyncpa [#allocation6], 0
    %s15 = scalar_lea.sflag [#allocation6], 1
    %16 = vsyncpa %s15, 0
    loop: start=0, step=1, limit=4
    $region2: #{tpu_custom_call.1} parent=1 // loop_pre_header
      _
    $region3: #{tpu_custom_call.1} parent=1 // loop_header
      %s18 = sphi 0, %s22
      %p19 = scmp.ge.s32.totalorder %s18, 4
      %s25 = sphi 0, %s44
      %s26 = sphi 0, %s40
      %s27 = sphi 0, %s36
      %s28 = sphi 0, %s25
      %s29 = sphi 0, %s26
      %s30 = sphi 0, %s27
      %s31 = sphi 0, %s28
      %s32 = sphi 0, %s29
      %s33 = sphi 0, %s30
      %s49 = sphi 0, %s51
      %s52 = sphi 0, %s49
      %s53 = sphi 0, %s52
      %s69 = sphi 0, %s53
      %s77 = sphi 0, %s79
      %s80 = sphi 0, %s77
      %s81 = sphi 0, %s80
      %s97 = sphi 0, %s81
      %s105 = sphi 0, %s107
      %s108 = sphi 0, %s105
      %s109 = sphi 0, %s108
      %s125 = sphi 0, %s109
      %s133 = sphi 0, %s135
      %s136 = sphi 0, %s133
      %s137 = sphi 0, %s136
      %s153 = sphi 0, %s137
    $region4: #{tpu_custom_call.1} parent=1 // loop_header_branch
      %21 = sbr.rel (%p19) target = $region8
    $region5: #{tpu_custom_call.1} parent=1 // loop_body
      %s23 = ssub.s32 %s18, 1
      %s24 = ssub.s32 %s18, 2
      %s34 = sadd.s32 1, %s27
      %p35 = scmp.ge.s32.totalorder %s34, 1
      %s36 = scalar_select %p35, 0, %s34
      %s37 = sadd.s32 1, %s26
      %s38 = scalar_select %p35, %s37, %s26
      %p39 = scmp.ge.s32.totalorder %s38, 1
      %s40 = scalar_select %p39, 0, %s38
      %s41 = sadd.s32 1, %s25
      %s42 = scalar_select %p39, %s41, %s25
      %p43 = scmp.ge.s32.totalorder %s42, 2
      %s44 = scalar_select %p43, 0, %s42
      %s45 = ssub.s32 %s25, %s44
      %s46 = ssub.s32 %s26, %s40
      %s47 = sor.u32 %s45, %s46
      %p48 = scmp.eq.s32.totalorder %s47, 0
      %s50 = sadd.s32 %s49, 1
      %s51 = scalar_select %p48, %s49, %s50
      %p54 = pneg %p48
      %p55 = scmp.eq.s32.totalorder %s18, 1
      %p56 = por %p54, %p55
      %p57 = scmp.ne.s32.totalorder %s49, %s52
      %p58 = scmp.eq.s32.totalorder %s18, 0
      %p59 = por %p57, %p58
      %p60 = scmp.ne.s32.totalorder %s49, %s52
      %p61 = scmp.eq.s32.totalorder %s23, 1
      %p62 = por %p60, %p61
      %p63 = scmp.ne.s32.totalorder %s52, %s53
      %p64 = scmp.eq.s32.totalorder %s23, 0
      %p65 = por %p63, %p64
      %p66 = scmp.ne.s32.totalorder %s52, %s53
      %p67 = scmp.eq.s32.totalorder %s24, 1
      %p68 = por %p66, %p67
      %p70 = scmp.ne.s32.totalorder %s53, %s69
      %p71 = scmp.eq.s32.totalorder %s24, 0
      %p72 = por %p70, %p71
      %s73 = ssub.s32 %s25, %s44
      %s74 = ssub.s32 %s27, %s36
      %s75 = sor.u32 %s73, %s74
      %p76 = scmp.eq.s32.totalorder %s75, 0
      %s78 = sadd.s32 %s77, 1
      %s79 = scalar_select %p76, %s77, %s78
      %p82 = pneg %p76
      %p83 = scmp.eq.s32.totalorder %s18, 1
      %p84 = por %p82, %p83
      %p85 = scmp.ne.s32.totalorder %s77, %s80
      %p86 = scmp.eq.s32.totalorder %s18, 0
      %p87 = por %p85, %p86
      %p88 = scmp.ne.s32.totalorder %s77, %s80
      %p89 = scmp.eq.s32.totalorder %s23, 1
      %p90 = por %p88, %p89
      %p91 = scmp.ne.s32.totalorder %s80, %s81
      %p92 = scmp.eq.s32.totalorder %s23, 0
      %p93 = por %p91, %p92
      %p94 = scmp.ne.s32.totalorder %s80, %s81
      %p95 = scmp.eq.s32.totalorder %s24, 1
      %p96 = por %p94, %p95
      %p98 = scmp.ne.s32.totalorder %s81, %s97
      %p99 = scmp.eq.s32.totalorder %s24, 0
      %p100 = por %p98, %p99
      %s101 = ssub.s32 %s25, %s44
      %s102 = ssub.s32 %s27, %s36
      %s103 = sor.u32 %s101, %s102
      %p104 = scmp.eq.s32.totalorder %s103, 0
      %s106 = sadd.s32 %s105, 1
      %s107 = scalar_select %p104, %s105, %s106
      %p110 = pneg %p104
      %p111 = scmp.eq.s32.totalorder %s18, 1
      %p112 = por %p110, %p111
      %p113 = scmp.ne.s32.totalorder %s105, %s108
      %p114 = scmp.eq.s32.totalorder %s18, 0
      %p115 = por %p113, %p114
      %p116 = scmp.ne.s32.totalorder %s105, %s108
      %p117 = scmp.eq.s32.totalorder %s23, 1
      %p118 = por %p116, %p117
      %p119 = scmp.ne.s32.totalorder %s108, %s109
      %p120 = scmp.eq.s32.totalorder %s23, 0
      %p121 = por %p119, %p120
      %p122 = scmp.ne.s32.totalorder %s108, %s109
      %p123 = scmp.eq.s32.totalorder %s24, 1
      %p124 = por %p122, %p123
      %p126 = scmp.ne.s32.totalorder %s109, %s125
      %p127 = scmp.eq.s32.totalorder %s24, 0
      %p128 = por %p126, %p127
      %s129 = ssub.s32 %s25, %s44
      %s130 = ssub.s32 %s26, %s40
      %s131 = sor.u32 %s129, %s130
      %p132 = scmp.eq.s32.totalorder %s131, 0
      %s134 = sadd.s32 %s133, 1
      %s135 = scalar_select %p132, %s133, %s134
      %p138 = pneg %p132
      %p139 = scmp.eq.s32.totalorder %s18, 1
      %p140 = por %p138, %p139
      %p141 = scmp.ne.s32.totalorder %s133, %s136
      %p142 = scmp.eq.s32.totalorder %s18, 0
      %p143 = por %p141, %p142
      %p144 = scmp.ne.s32.totalorder %s133, %s136
      %p145 = scmp.eq.s32.totalorder %s23, 1
      %p146 = por %p144, %p145
      %p147 = scmp.ne.s32.totalorder %s136, %s137
      %p148 = scmp.eq.s32.totalorder %s23, 0
      %p149 = por %p147, %p148
      %p150 = scmp.ne.s32.totalorder %s136, %s137
      %p151 = scmp.eq.s32.totalorder %s24, 1
      %p152 = por %p150, %p151
      %p154 = scmp.ne.s32.totalorder %s137, %s153
      %p155 = scmp.eq.s32.totalorder %s24, 0
      %p156 = por %p154, %p155
      %p157 = scmp.le.s32.totalorder 1, %s18
      %p158 = scmp.lt.s32.totalorder %s18, 3
      %p159 = pnand %p157, %p158
      %p160 = pneg %p159
      // Predicated region
      $region9: #{tpu_custom_call.1} parent=5 // pred_check
        _
      $region10: #{tpu_custom_call.1} parent=5 // pred_check_branch
        %162 = sbr.rel (%p159) target = $region12
      $region11: #{tpu_custom_call.1} parent=5 // pred_region
        %s163 = ssub.s32 %s18, 1
      $region12: #{tpu_custom_call.1} parent=5 // pred_fallthru
        _
      %p164 = scmp.lt.s32.totalorder %s18, 2
      // Predicated region
      $region13: #{tpu_custom_call.1} parent=5 // pred_check
        %p165 = pneg %p164
      $region14: #{tpu_custom_call.1} parent=5 // pred_check_branch
        %167 = sbr.rel (%p165) target = $region16
      $region15: #{tpu_custom_call.1} parent=5 // pred_region
        // Predicated region
        $region17: #{tpu_custom_call.1} parent=15 // pred_check
          %p168 = pneg %p59
        $region18: #{tpu_custom_call.1} parent=15 // pred_check_branch
          %170 = sbr.rel (%p168) target = $region20
        $region19: #{tpu_custom_call.1} parent=15 // pred_region
          %s171 = sand.u32 %s49, 1
          %s172 = scalar_lea.sflag [#allocation5], %s171
          %s173 = sand.u32 %s49, 1
          %s174 = smul.addr %s173, 16
          %s175 = scalar_lea.vmem [#allocation4], %s174
          %s176 = smul.u32 2, %s25
          %178 = vsyncadd %s172, 0
          %s179 = smul.addr %s176, 3
          %s180 = sadd.s32 %s26, %s179
          %s181 = smul.addr %s180, 8
          %s182 = scalar_lea.hbm %s0, %s181
          %s183 = sshll.u32 %s182, 4
          %s184 = int_to_ptr.hbm [resolvable:$true] %s183
          %s185 = sshll.u32 %s175, 4
          %s186 = int_to_ptr.vmem [resolvable:$true] %s185
          %191 = dma.hbm_to_vmem [thread:$0]  %s184, 256, %s186, %s172, 384, 128, 8
        $region20: #{tpu_custom_call.1} parent=15 // pred_fallthru
          _
        // Predicated region
        $region21: #{tpu_custom_call.1} parent=15 // pred_check
          %p192 = pneg %p87
        $region22: #{tpu_custom_call.1} parent=15 // pred_check_branch
          %194 = sbr.rel (%p192) target = $region24
        $region23: #{tpu_custom_call.1} parent=15 // pred_region
          %s195 = sand.u32 %s18, 1
          %s196 = scalar_lea.sflag [#allocation8], %s195
          %s197 = sand.u32 %s77, 1
          %s198 = smul.addr %s197, 16
          %s199 = scalar_lea.vmem [#allocation7], %s198
          %s200 = smul.u32 2, %s25
          %202 = vsyncadd %s196, 0
          %s203 = sadd.s32 %s27, 1
          %s204 = smul.addr %s200, 3
          %s205 = sadd.s32 %s203, %s204
          %s206 = smul.addr %s205, 8
          %s207 = scalar_lea.hbm %s1, %s206
          %s208 = sshll.u32 %s207, 4
          %s209 = int_to_ptr.hbm [resolvable:$true] %s208
          %s210 = sshll.u32 %s199, 4
          %s211 = int_to_ptr.vmem [resolvable:$true] %s210
          %216 = dma.hbm_to_vmem [thread:$0]  %s209, 256, %s211, %s196, 384, 128, 8
        $region24: #{tpu_custom_call.1} parent=15 // pred_fallthru
          _
        // Predicated region
        $region25: #{tpu_custom_call.1} parent=15 // pred_check
          %p217 = pneg %p115
        $region26: #{tpu_custom_call.1} parent=15 // pred_check_branch
          %219 = sbr.rel (%p217) target = $region28
        $region27: #{tpu_custom_call.1} parent=15 // pred_region
          %s220 = sand.u32 %s18, 1
          %s221 = scalar_lea.sflag [#allocation8], %s220
          %s222 = sand.u32 %s105, 1
          %s223 = smul.addr %s222, 16
          %s224 = scalar_lea.vmem [#allocation9], %s223
          %s225 = smul.u32 2, %s25
          %227 = vsyncadd %s221, 0
          %s228 = sadd.s32 %s27, 2
          %s229 = smul.addr %s225, 3
          %s230 = sadd.s32 %s228, %s229
          %s231 = smul.addr %s230, 8
          %s232 = scalar_lea.hbm %s2, %s231
          %s233 = sshll.u32 %s232, 4
          %s234 = int_to_ptr.hbm [resolvable:$true] %s233
          %s235 = sshll.u32 %s224, 4
          %s236 = int_to_ptr.vmem [resolvable:$true] %s235
          %241 = dma.hbm_to_vmem [thread:$0]  %s234, 256, %s236, %s221, 384, 128, 8
        $region28: #{tpu_custom_call.1} parent=15 // pred_fallthru
          _
      $region16: #{tpu_custom_call.1} parent=5 // pred_fallthru
        _
      %p242 = scmp.le.s32.totalorder 1, %s18
      %p243 = scmp.lt.s32.totalorder %s18, 3
      %p244 = pnand %p242, %p243
      %p245 = pneg %p244
      // Predicated region
      $region29: #{tpu_custom_call.1} parent=5 // pred_check
        _
      $region30: #{tpu_custom_call.1} parent=5 // pred_check_branch
        %247 = sbr.rel (%p244) target = $region32
      $region31: #{tpu_custom_call.1} parent=5 // pred_region
        %s248 = ssub.s32 %s18, 1
        %s249 = sand.u32 %s52, 1
        %s250 = scalar_lea.sflag [#allocation5], %s249
        %s251 = sand.u32 %s52, 1
        %s252 = smul.addr %s251, 16
        %s253 = scalar_lea.vmem [#allocation4], %s252
        // Predicated region
        $region33: #{tpu_custom_call.1} parent=31 // pred_check
          %p254 = pneg %p65
        $region34: #{tpu_custom_call.1} parent=31 // pred_check_branch
          %256 = sbr.rel (%p254) target = $region36
        $region35: #{tpu_custom_call.1} parent=31 // pred_region
          %258 = dma.done %s250, 256
        $region36: #{tpu_custom_call.1} parent=31 // pred_fallthru
          _
        %s259 = sand.u32 %s23, 1
        %s260 = scalar_lea.sflag [#allocation8], %s259
        %s261 = sand.u32 %s80, 1
        %s262 = smul.addr %s261, 16
        %s263 = scalar_lea.vmem [#allocation7], %s262
        // Predicated region
        $region37: #{tpu_custom_call.1} parent=31 // pred_check
          %p264 = pneg %p93
        $region38: #{tpu_custom_call.1} parent=31 // pred_check_branch
          %266 = sbr.rel (%p264) target = $region40
        $region39: #{tpu_custom_call.1} parent=31 // pred_region
          %268 = dma.done %s260, 256
        $region40: #{tpu_custom_call.1} parent=31 // pred_fallthru
          _
        %s269 = sand.u32 %s23, 1
        %s270 = scalar_lea.sflag [#allocation8], %s269
        %s271 = sand.u32 %s108, 1
        %s272 = smul.addr %s271, 16
        %s273 = scalar_lea.vmem [#allocation9], %s272
        // Predicated region
        $region41: #{tpu_custom_call.1} parent=31 // pred_check
          %p274 = pneg %p121
        $region42: #{tpu_custom_call.1} parent=31 // pred_check_branch
          %276 = sbr.rel (%p274) target = $region44
        $region43: #{tpu_custom_call.1} parent=31 // pred_region
          %278 = dma.done %s270, 256
        $region44: #{tpu_custom_call.1} parent=31 // pred_fallthru
          _
        %s279 = sand.u32 %s52, 1
        %s280 = scalar_lea.sflag [#allocation5], %s279
        %s281 = sand.u32 %s52, 1
        %s282 = smul.addr %s281, 16
        %s283 = scalar_lea.vmem [#allocation4], %s282
        %p284 = pneg %p65
        %p285 = pneg %p62
        %s286 = sand.u32 %s23, 1
        %s287 = scalar_lea.sflag [#allocation8], %s286
        %s288 = sand.u32 %s80, 1
        %s289 = smul.addr %s288, 16
        %s290 = scalar_lea.vmem [#allocation7], %s289
        %p291 = pneg %p93
        %p292 = pneg %p90
        %s293 = sand.u32 %s23, 1
        %s294 = scalar_lea.sflag [#allocation8], %s293
        %s295 = sand.u32 %s108, 1
        %s296 = smul.addr %s295, 16
        %s297 = scalar_lea.vmem [#allocation9], %s296
        %p298 = pneg %p121
        %p299 = pneg %p118
        %p300 = pneg %p149
        %p301 = pneg %p146
        %s302 = sand.u32 %s136, 1
        %s303 = scalar_lea.sflag [#allocation6], %s302
        %s304 = sand.u32 %s136, 1
        %s305 = smul.addr %s304, 16
        %s306 = scalar_lea.vmem [#allocation10], %s305
        %s307 = smul.u32 2, %s28
        %s308 = smul.u32 2, %s28
        %s309 = smul.u32 2, %s28
        %s310 = smul.u32 2, %s28
        %p312 = scmp.eq.s32.totalorder %s30, 0
        // Predicated region
        $region45: #{tpu_custom_call.1} parent=31 // pred_check
          %p313 = pneg %p312
        $region46: #{tpu_custom_call.1} parent=31 // pred_check_branch
          %315 = sbr.rel (%p313) target = $region48
        $region47: #{tpu_custom_call.1} parent=31 // pred_region
          %vm316 = vcmask 122880
          %317 = vst.msk [vmem:[#allocation2] sm:$0x1] %vm316, -inf
          %318 = vst.msk [vmem:[#allocation2 + $0x1] sm:$0x1] %vm316, -inf
          %319 = vst.msk [vmem:[#allocation3] sm:$0x1] %vm316, 0.0
          %320 = vst.msk [vmem:[#allocation3 + $0x1] sm:$0x1] %vm316, 0.0
          %vm321 = vcmask 130048
          %322 = vst.msk [vmem:[%s306] sm:$0xff] %vm321, 0.0
          %323 = vst.msk [vmem:[%s306 + $0x8] sm:$0xff] %vm321, 0.0
        $region48: #{tpu_custom_call.1} parent=31 // pred_fallthru
          _
        loop: start=0, step=1, limit=2
        $region49: #{tpu_custom_call.1} parent=31 // loop_pre_header
          _
        $region50: #{tpu_custom_call.1} parent=31 // loop_header
          %s325 = sphi 0, %s329
          %p326 = scmp.ge.s32.totalorder %s325, 2
        $region51: #{tpu_custom_call.1} parent=31 // loop_header_branch
          %328 = sbr.rel (%p326) target = $region55
        $region52: #{tpu_custom_call.1} parent=31 // loop_body
          %s330 = smul.u32 %s325, 8
          %s331 = scalar_lea.vmem %s253, %s330 [#allocation4]
          %v332 = vld [vmem:[%s331] sm:$0xff]
          %s333 = scalar_lea.vmem %s263, %s330 [#allocation7]
          %v334 = vld [vmem:[%s333] sm:$0xff]
          %v335 = vmul.f32 %v334, 0.35355338
          %s336 = scalar_lea.vmem %s273, %s330 [#allocation9]
          %v337 = vld [vmem:[%s336] sm:$0xff]
          %v338 = vpack.c.bf16 %v332, %v332
          %v339 = vpack.c.bf16 %v335, %v335
          %v340 = vpack.c.bf16 %v337, %v337
          %341 = vxpose.xlu0.c.b16.start [1/8] %v339, 128
          %342 = vxpose.xlu0.c.b16.cont [2/8] 0, 128
          %343 = vxpose.xlu0.c.b16.cont [3/8] 0, 128
          %344 = vxpose.xlu0.c.b16.cont [4/8] 0, 128
          %345 = vxpose.xlu0.c.b16.cont [5/8] 0, 128
          %346 = vxpose.xlu0.c.b16.cont [6/8] 0, 128
          %347 = vxpose.xlu0.c.b16.cont [7/8] 0, 128
          %348 = vxpose.xlu0.c.b16.end [8/8] 0, 128
          %v349 = vpop.trf.xlu0
          %v350 = vpop.trf.xlu0
          %v351 = vpop.trf.xlu0
          %v352 = vpop.trf.xlu0
          %v353 = vpop.trf.xlu0
          %v354 = vpop.trf.xlu0
          %v355 = vpop.trf.xlu0
          %v356 = vpop.trf.xlu0
          %vm357 = vcmask 64512
          %v359 = vsel %vm357, %v349, 0
          %vm361 = vcmask 1043456
          %v363 = vsel %vm361, %v338, 0
          %365 = vmatpush.bf16.msra.mxu0 0
          %366 = vmatpush.bf16.msra.mxu0 0
          %367 = vmatpush.bf16.msra.mxu0 0
          %368 = vmatpush.bf16.msra.mxu0 0
          %369 = vmatpush.bf16.msra.mxu0 0
          %370 = vmatpush.bf16.msra.mxu0 0
          %371 = vmatpush.bf16.msra.mxu0 0
          %372 = vmatpush.bf16.msra.mxu0 %v363
          %373 = vmatmul.bf16.gmra.mxu0 %v359
          %v374 = vpop.f32.mrf.mxu0
          %v375 = vadd.f32 0.0, %v374
          %v376 = vpop.f32.mrf.mxu0
          %v377 = vadd.f32 0.0, %v376
          %378 = vdwg.mxu0
          %s379 = scalar_lea.vmem [#allocation2], %s325
          %v380 = vld [vmem:[%s379] sm:$0x1]
          %vm381 = vcmask 130048
          %v382 = vsel %vm381, %v375, -inf
          %v383 = vsel %vm381, %v377, -inf
          %v384 = vmax.f32 %v382, %v383
          %v385 = vrot.slane %v384, 4
          %v386 = vmax.f32 %v384, %v385
          %v387 = vrot.slane %v386, 2
          %v388 = vmax.f32 %v386, %v387
          %v389 = vrot.slane %v388, 1
          %v390 = vmax.f32 %v388, %v389
          %v391 = vmax.f32 %v380, %v390
          %v392 = vsub.f32 %v380, %v391
          %v393 = vmul.f32 %v392, 1.442695
          %v394 = vpow.pop %v393
          %v396 = vperm.slane %v391, 0
          %v398 = vsub.f32 %v375, %v396
          %v399 = vsub.f32 %v377, %v396
          %v400 = vmul.f32 %v398, 1.442695
          %v401 = vpow.pop %v400
          %v402 = vmul.f32 %v399, 1.442695
          %v403 = vpow.pop %v402
          %s404 = scalar_lea.vmem [#allocation3], %s325
          %v405 = vld [vmem:[%s404] sm:$0x1]
          %v406 = vmul.f32 %v394, %v405
          %v407 = vsel %vm381, %v401, 0.0
          %v408 = vsel %vm381, %v403, 0.0
          %v409 = vadd.f32 %v407, %v408
          %v410 = vrot.slane %v409, 4
          %v411 = vadd.f32 %v409, %v410
          %v412 = vrot.slane %v411, 2
          %v413 = vadd.f32 %v411, %v412
          %v414 = vrot.slane %v413, 1
          %v415 = vadd.f32 %v413, %v414
          %v416 = vadd.f32 %v406, %v415
          %vm417 = vcmask 122880
          %418 = vst.msk [vmem:[%s404] sm:$0x1] %vm417, %v416
          %419 = vst.msk [vmem:[%s379] sm:$0x1] %vm417, %v391
          %v420 = vpack.c.bf16 %v403, %v401
          %v422 = vsel %vm381, %v340, 0
          %424 = vmatpush.bf16.msra.mxu0 0
          %425 = vmatpush.bf16.msra.mxu0 0
          %426 = vmatpush.bf16.msra.mxu0 0
          %427 = vmatpush.bf16.msra.mxu0 0
          %428 = vmatpush.bf16.msra.mxu0 0
          %429 = vmatpush.bf16.msra.mxu0 0
          %430 = vmatpush.bf16.msra.mxu0 0
          %431 = vmatpush.bf16.msra.mxu0 %v420
          %432 = vmatmul.bf16.gmra.mxu0 %v422
          %v433 = vpop.f32.mrf.mxu0
          %v434 = vadd.f32 0.0, %v433
          %v435 = vpop.f32.mrf.mxu0
          %436 = vdwg.mxu0
          %s437 = scalar_lea.vmem %s306, %s330 [#allocation10]
          %v438 = vld [vmem:[%s437] sm:$0xff]
          %v440 = vperm.slane %v394, 0
          %v442 = vmul.f32 %v440, %v438
          %v443 = vadd.f32 %v442, %v434
          %444 = vst.msk [vmem:[%s437] sm:$0xff] %vm381, %v443
        $region53: #{tpu_custom_call.1} parent=31 // loop_footer
          %s329 = sadd.s32 1, %s325
        $region54: #{tpu_custom_call.1} parent=31 // loop_footer_branch
          %324 = sbr.rel target = $region50
        $region55: #{tpu_custom_call.1} parent=31 // loop_exit
          _
        // Predicated region
        $region56: #{tpu_custom_call.1} parent=31 // pred_check
          %p445 = pneg %p312
        $region57: #{tpu_custom_call.1} parent=31 // pred_check_branch
          %447 = sbr.rel (%p445) target = $region59
        $region58: #{tpu_custom_call.1} parent=31 // pred_region
          loop: start=0, step=1, limit=2
          $region60: #{tpu_custom_call.1} parent=58 // loop_pre_header
            _
          $region61: #{tpu_custom_call.1} parent=58 // loop_header
            %s449 = sphi 0, %s453
            %p450 = scmp.ge.s32.totalorder %s449, 2
          $region62: #{tpu_custom_call.1} parent=58 // loop_header_branch
            %452 = sbr.rel (%p450) target = $region66
          $region63: #{tpu_custom_call.1} parent=58 // loop_body
            %s454 = scalar_lea.vmem [#allocation3], %s449
            %v455 = vld [vmem:[%s454] sm:$0x1]
            %v456 = vrcp.pop %v455
            %v457 = vmul.f32 %v455, %v456
            %v458 = vsub.f32 1.0, %v457
            %v459 = vmul.f32 %v456, %v458
            %v460 = vadd.f32 %v456, %v459
            %vm461 = vweird.f32 %v455
            %vm462 = vweird.f32 %v456
            %vm463 = vmor %vm461, %vm462
            %v464 = vsel %vm463, %v456, %v460
            %v465 = vand.u32 2147483647, %v455
            %vm466 = vcmp.eq.f32.partialorder %v465, 8.507059e+37
            %v467 = vand.u32 %v455, 2147483648
            %v468 = vor.u32 1.1754944e-38, %v467
            %v469 = vsel %vm466, %v468, %v464
            %v470 = vmul.f32 1.0, %v469
            %s471 = smul.u32 %s449, 8
            %s472 = scalar_lea.vmem %s306, %s471 [#allocation10]
            %v473 = vld [vmem:[%s472] sm:$0xff]
            %v475 = vperm.slane %v470, 0
            %v477 = vmul.f32 %v473, %v475
            %vm478 = vcmask 130048
            %479 = vst.msk [vmem:[%s472] sm:$0xff] %vm478, %v477
          $region64: #{tpu_custom_call.1} parent=58 // loop_footer
            %s453 = sadd.s32 1, %s449
          $region65: #{tpu_custom_call.1} parent=58 // loop_footer_branch
            %448 = sbr.rel target = $region61
          $region66: #{tpu_custom_call.1} parent=58 // loop_exit
            _
        $region59: #{tpu_custom_call.1} parent=31 // pred_fallthru
          _
        %s480 = sand.u32 %s136, 1
        %s481 = scalar_lea.sflag [#allocation6], %s480
        %s482 = sand.u32 %s136, 1
        %s483 = smul.addr %s482, 16
        %s484 = scalar_lea.vmem [#allocation10], %s483
        // Predicated region
        $region67: #{tpu_custom_call.1} parent=31 // pred_check
          %p485 = pneg %p146
        $region68: #{tpu_custom_call.1} parent=31 // pred_check_branch
          %487 = sbr.rel (%p485) target = $region70
        $region69: #{tpu_custom_call.1} parent=31 // pred_region
          %s488 = smul.u32 2, %s28
          %490 = vsyncadd %s481, 0
          %s491 = sadd.s32 %s29, %s488
          %s492 = smul.addr %s491, 8
          %s493 = scalar_lea.hbm %s3, %s492
          %s494 = sshll.u32 %s484, 4
          %s495 = int_to_ptr.vmem [resolvable:$true] %s494
          %s496 = sshll.u32 %s493, 4
          %s497 = int_to_ptr.hbm [resolvable:$true] %s496
          %502 = dma.vmem_to_hbm [thread:$0]  %s495, 256, %s497, %s481, 128, 128, 8
        $region70: #{tpu_custom_call.1} parent=31 // pred_fallthru
          _
      $region32: #{tpu_custom_call.1} parent=5 // pred_fallthru
        _
      %p503 = scmp.le.s32.totalorder 2, %s18
      // Predicated region
      $region71: #{tpu_custom_call.1} parent=5 // pred_check
        %p504 = pneg %p503
      $region72: #{tpu_custom_call.1} parent=5 // pred_check_branch
        %506 = sbr.rel (%p504) target = $region74
      $region73: #{tpu_custom_call.1} parent=5 // pred_region
        %s507 = ssub.s32 %s18, 2
        // Predicated region
        $region75: #{tpu_custom_call.1} parent=73 // pred_check
          %p508 = pneg %p152
        $region76: #{tpu_custom_call.1} parent=73 // pred_check_branch
          %510 = sbr.rel (%p508) target = $region78
        $region77: #{tpu_custom_call.1} parent=73 // pred_region
          %s511 = sand.u32 %s137, 1
          %s512 = scalar_lea.sflag [#allocation6], %s511
          %s513 = sand.u32 %s137, 1
          %s514 = smul.addr %s513, 16
          %s515 = scalar_lea.vmem [#allocation10], %s514
          %517 = dma.done %s512, 256
        $region78: #{tpu_custom_call.1} parent=73 // pred_fallthru
          _
      $region74: #{tpu_custom_call.1} parent=5 // pred_fallthru
        _
    $region6: #{tpu_custom_call.1} parent=1 // loop_footer
      %s22 = sadd.s32 1, %s18
    $region7: #{tpu_custom_call.1} parent=1 // loop_footer_branch
      %17 = sbr.rel target = $region3
    $region8: #{tpu_custom_call.1} parent=1 // loop_exit
      _
    %518 = vsyncpa [#allocation5], 1
    %s519 = scalar_lea.sflag [#allocation5], 1
    %520 = vsyncpa %s519, 1
    %521 = vsyncpa [#allocation8], 1
    %s522 = scalar_lea.sflag [#allocation8], 1
    %523 = vsyncpa %s522, 1
    %524 = vsyncpa [#allocation6], 1
    %s525 = scalar_lea.sflag [#allocation6], 1
    %526 = vsyncpa %s525, 1

</llo_original>
